<compile_context>
chip_gen: v6e
topology: v6e:2x2x1
jax: 0.10.0
libtpu: 0.0.40
codegen_flags: <defaults>
</compile_context>

<pallas_src>
import itertools
import numpy as np

import jax
import jax.numpy as jnp
from jax.experimental import pallas as pl
from jax.experimental.pallas import tpu as pltpu


def _round_up(x, m):
    return ((x + m - 1) // m) * m


def _cdiv(a, b):
    return -(-a // b)


def _num_tensorcores_per_chip():
    """Best-effort: v7x has 2 TensorCores per chip, v5e/v6e have 1."""
    try:
        kind = (jax.devices()[0].device_kind or "").lower()
        if "v7" in kind:
            return 2
    except Exception:
        pass
    return 1


def _vmem_estimate_bytes(tq, C, M_pad):
    # Conservative: everything double-buffered, all f32.
    return 4 * (2 * tq * C + 2 * tq * 4 + 2 * 8 * M_pad + 2 * C * M_pad
                + 2 * tq * M_pad)


def _make_cost_kernel(cost_bbox, cost_giou):
    def _cost_kernel(logits_ref, obox_ref, ttab_ref, neg_onehot_ref, c_ref):
        # --- classification cost ------------------------------------------------
        # softmax normalization is deferred: one-hot selects a single prob column,
        # so dot(e, W) * (1/sum(e)) == dot(softmax, W).  W is pre-scaled by
        # -cost_class in the wrapper, so this term is already fully weighted.
        logits = logits_ref[...]                                    # [TQ, C]
        mx = jnp.max(logits, axis=-1, keepdims=True)
        e = jnp.exp(logits - mx)
        inv_sum = 1.0 / jnp.sum(e, axis=-1, keepdims=True)          # exact, [TQ, 1]
        cost_cls = jnp.dot(e, neg_onehot_ref[...],
                           preferred_element_type=jnp.float32) * inv_sum  # [TQ, M]

        ob = obox_ref[...]                                          # [TQ, 4] xyxy
        ttab = ttab_ref[...]                                        # [8, M]
        tx0 = ttab[0:1, :]; ty0 = ttab[1:2, :]
        tx1 = ttab[2:3, :]; ty1 = ttab[3:4, :]
        area2 = ttab[4:5, :]                                        # precomputed

        ox0 = ob[:, 0:1]; oy0 = ob[:, 1:2]; ox1 = ob[:, 2:3]; oy1 = ob[:, 3:4]

        # --- shared min/max terms (used by both L1 and GIoU) ---------------------
        lt_x = jnp.maximum(ox0, tx0); lt_y = jnp.maximum(oy0, ty0)
        rb_x = jnp.minimum(ox1, tx1); rb_y = jnp.minimum(oy1, ty1)
        elt_x = jnp.minimum(ox0, tx0); elt_y = jnp.minimum(oy0, ty0)
        erb_x = jnp.maximum(ox1, tx1); erb_y = jnp.maximum(oy1, ty1)

        # --- L1 box cost (torch.cdist p=1): |a-b| = max(a,b) - min(a,b) ----------
        cost_l1 = ((lt_x - elt_x) + (lt_y - elt_y) +
                   (erb_x - rb_x) + (erb_y - rb_y))                 # [TQ, M]

        # --- generalized IoU cost ------------------------------------------------
        area1 = (ox1 - ox0) * (oy1 - oy0)                           # [TQ, 1]
        inter = jnp.maximum(rb_x - lt_x, 0.0) * jnp.maximum(rb_y - lt_y, 0.0)
        union = area1 + area2 - inter
        iou = inter / (union + 1e-6)
        area = jnp.maximum(erb_x - elt_x, 0.0) * jnp.maximum(erb_y - elt_y, 0.0)
        giou = iou - (area - union) / (area + 1e-6)

        # cost_cls already carries -cost_class; GIoU cost is -giou * cost_giou.
        c_ref[...] = cost_bbox * cost_l1 + cost_cls - cost_giou * giou
    return _cost_kernel


def pallas_cost_matrix(pred_logits, pred_boxes, tgt_ids, tgt_bbox,
                       cost_class=1.0, cost_bbox=2.0, cost_giou=5.0,
                       tq_max=256):
    """Returns cost matrix C of shape [B, Q, M] (M = total targets across batch)."""
    B, Q, C = pred_logits.shape
    N = B * Q
    M = int(tgt_bbox.shape[0])
    if M == 0:
        return jnp.zeros((B, Q, 0), jnp.float32)

    # Pad M to a lane-dense multiple of 128 (unmasked stores, full MXU tile).
    M_pad = _round_up(M, 128)

    # VMEM budget guard: keep the conservative estimate well under the 32 MiB
    # scoped default (v7x physical VMEM is only 64 MiB).
    tq_cap = max(8, _round_up(min(tq_max, max(N, 8)), 8))
    while tq_cap > 8 and _vmem_estimate_bytes(tq_cap, C, M_pad) > (24 << 20):
        tq_cap = max(8, _round_up(tq_cap // 2, 8))

    # Tile-count-first heuristic: bounds padding to <8 rows per tile; single grid
    # step on single-TC chips, even tile count on v7x for core balance.
    min_tiles = 2 if _num_tensorcores_per_chip() == 2 else 1
    num_tiles = max(min_tiles, _cdiv(N, tq_cap))
    if min_tiles == 2 and num_tiles % 2:
        num_tiles += 1
    tq = _round_up(_cdiv(N, num_tiles), 8)
    N_pad = num_tiles * tq

    logits = pred_logits.reshape(N, C).astype(jnp.float32)
    obox = pred_boxes.reshape(N, 4).astype(jnp.float32)
    if N_pad != N:
        logits = jnp.pad(logits, ((0, N_pad - N), (0, 0)))
        obox = jnp.pad(obox, ((0, N_pad - N), (0, 0)))

    # Target table: rows 0..3 = xyxy coords, row 4 = precomputed target area
    # (grid-invariant, hoisted out of the kernel). Padded columns are zeros.
    tb = tgt_bbox.astype(jnp.float32)
    area2 = (tb[:, 2] - tb[:, 0]) * (tb[:, 3] - tb[:, 1])
    ttab = jnp.zeros((8, M_pad), jnp.float32)
    ttab = ttab.at[0:4, :M].set(tb.T)
    ttab = ttab.at[4, :M].set(area2)

    # Pre-transposed one-hot [C, M_pad], pre-scaled by -cost_class so the class
    # weight and the negation are folded into the MXU matmul. Padded columns 0.
    neg_onehot_t = jnp.zeros((C, M_pad), jnp.float32)
    neg_onehot_t = neg_onehot_t.at[:, :M].set(
        (-float(cost_class)) * jax.nn.one_hot(tgt_ids, C, dtype=jnp.float32).T)

    c = pl.pallas_call(
        _make_cost_kernel(float(cost_bbox), float(cost_giou)),
        out_shape=jax.ShapeDtypeStruct((N_pad, M_pad), jnp.float32),
        grid=(num_tiles,),
        in_specs=[
            pl.BlockSpec((tq, C), lambda i: (i, 0)),
            pl.BlockSpec((tq, 4), lambda i: (i, 0)),
            pl.BlockSpec((8, M_pad), lambda i: (0, 0)),       # grid-invariant
            pl.BlockSpec((C, M_pad), lambda i: (0, 0)),       # grid-invariant
        ],
        out_specs=pl.BlockSpec((tq, M_pad), lambda i: (i, 0)),
        compiler_params=pltpu.CompilerParams(dimension_semantics=("parallel",)),
    )(logits, obox, ttab, neg_onehot_t)
    return c[:N, :M].reshape(B, Q, M)


def _linear_sum_assignment_small(cost):
    """Exact assignment for tiny rectangular cost matrices (brute force)."""
    # TODO(synk): the Hungarian algorithm is a sequential host-side routine
    # (scipy.optimize.linear_sum_assignment); it has no clean Pallas equivalent
    # and this brute force is only valid for toy sizes.
    n, m = cost.shape
    if n == 0 or m == 0:
        return np.zeros((0,), np.int64), np.zeros((0,), np.int64)
    best_pairs, best_cost = None, np.inf
    if m <= n:
        for rows in itertools.permutations(range(n), m):
            s = cost[list(rows), list(range(m))].sum()
            if s < best_cost:
                best_cost, best_pairs = s, list(zip(rows, range(m)))
    else:
        for cols in itertools.permutations(range(m), n):
            s = cost[list(range(n)), list(cols)].sum()
            if s < best_cost:
                best_cost, best_pairs = s, list(zip(range(n), cols))
    best_pairs = sorted(best_pairs)
    i = np.array([p[0] for p in best_pairs], dtype=np.int64)
    j = np.array([p[1] for p in best_pairs], dtype=np.int64)
    return i, j


class HungarianMatcher:
    def __init__(self, cost_class=1.0, cost_bbox=2.0, cost_giou=5.0):
        assert cost_class != 0 or cost_bbox != 0 or cost_giou != 0, "all costs cant be 0"
        self.cost_class = cost_class
        self.cost_bbox = cost_bbox
        self.cost_giou = cost_giou

    def __call__(self, outputs, targets):
        pred_logits = outputs["pred_logits"]
        pred_boxes = outputs["pred_boxes"]
        tgt_ids = jnp.concatenate([t["labels"] for t in targets])
        tgt_bbox = jnp.concatenate([t["boxes"] for t in targets])

        C = pallas_cost_matrix(pred_logits, pred_boxes, tgt_ids, tgt_bbox,
                               self.cost_class, self.cost_bbox, self.cost_giou)
        C = jax.block_until_ready(C)
        C_np = np.asarray(C)

        sizes = [int(t["boxes"].shape[0]) for t in targets]
        indices = []
        off = 0
        for b, sz in enumerate(sizes):
            c_b = C_np[b, :, off:off + sz]
            indices.append(_linear_sum_assignment_small(c_b))
            off += sz
        return indices, C


def _reference_cost_matrix(pred_logits, pred_boxes, tgt_ids, tgt_bbox,
                           cost_class=1.0, cost_bbox=2.0, cost_giou=5.0):
    """Pure numpy reference of the cost matrix for validation."""
    B, Q, Cc = pred_logits.shape
    logits = np.asarray(pred_logits, np.float64).reshape(B * Q, Cc)
    ob = np.asarray(pred_boxes, np.float64).reshape(B * Q, 4)
    tb = np.asarray(tgt_bbox, np.float64)
    ids = np.asarray(tgt_ids)

    ex = np.exp(logits - logits.max(-1, keepdims=True))
    prob = ex / ex.sum(-1, keepdims=True)
    cost_cls = -prob[:, ids]
    cost_l1 = np.abs(ob[:, None, :] - tb[None, :, :]).sum(-1)

    area1 = (ob[:, 2] - ob[:, 0]) * (ob[:, 3] - ob[:, 1])
    area2 = (tb[:, 2] - tb[:, 0]) * (tb[:, 3] - tb[:, 1])
    lt = np.maximum(ob[:, None, :2], tb[None, :, :2])
    rb = np.minimum(ob[:, None, 2:], tb[None, :, 2:])
    wh = np.clip(rb - lt, 0, None)
    inter = wh[..., 0] * wh[..., 1]
    union = area1[:, None] + area2[None, :] - inter
    iou = inter / (union + 1e-6)
    elt = np.minimum(ob[:, None, :2], tb[None, :, :2])
    erb = np.maximum(ob[:, None, 2:], tb[None, :, 2:])
    ewh = np.clip(erb - elt, 0, None)
    earea = ewh[..., 0] * ewh[..., 1]
    giou = iou - (earea - union) / (earea + 1e-6)

    C = cost_bbox * cost_l1 + cost_class * cost_cls + cost_giou * (-giou)
    return C.reshape(B, Q, -1)


if __name__ == "__main__":
    B, Q, NUM_CLASSES = 2, 8, 32
    sizes = [3, 4]  # number of target boxes per batch element
    key = jax.random.PRNGKey(0)
    k1, k2, k3, k4 = jax.random.split(key, 4)

    pred_logits = jax.random.normal(k1, (B, Q, NUM_CLASSES), dtype=jnp.float32)
    # valid xyxy boxes: x1 >= x0, y1 >= y0
    p_xy0 = jax.random.uniform(k2, (B, Q, 2), minval=0.0, maxval=0.5)
    p_wh = jax.random.uniform(k3, (B, Q, 2), minval=0.05, maxval=0.5)
    pred_boxes = jnp.concatenate([p_xy0, p_xy0 + p_wh], axis=-1)

    targets = []
    off_keys = jax.random.split(k4, len(sizes) * 3)
    for b, sz in enumerate(sizes):
        kl, kxy, kwh = off_keys[3 * b:3 * b + 3]
        labels = jax.random.randint(kl, (sz,), 0, NUM_CLASSES)
        t_xy0 = jax.random.uniform(kxy, (sz, 2), minval=0.0, maxval=0.5)
        t_wh = jax.random.uniform(kwh, (sz, 2), minval=0.05, maxval=0.5)
        boxes = jnp.concatenate([t_xy0, t_xy0 + t_wh], axis=-1)
        targets.append({"labels": labels, "boxes": boxes})

    matcher = HungarianMatcher()
    indices, C = matcher({"pred_logits": pred_logits, "pred_boxes": pred_boxes}, targets)
    C = jax.block_until_ready(C)

    # Validate cost matrix against pure numpy (float64, exact-division) reference.
    tgt_ids = jnp.concatenate([t["labels"] for t in targets])
    tgt_bbox = jnp.concatenate([t["boxes"] for t in targets])
    C_ref = _reference_cost_matrix(pred_logits, pred_boxes, tgt_ids, tgt_bbox)
    if not np.allclose(np.asarray(C), C_ref, atol=2e-3, rtol=2e-3):
        raise AssertionError("Pallas cost matrix mismatch vs reference")
    for (i, j), sz in zip(indices, sizes):
        assert len(i) == len(j) == min(Q, sz)

    print("KERNEL_OK")
</pallas_src>

<mosaic_0001>
module attributes {stable_mosaic.version = 11 : i64} {
  func.func @_cost_kernel(%arg0: i32, %arg1: memref<16x32xf32, #tpu.memory_space<vmem>>, %arg2: memref<16x4xf32, #tpu.memory_space<vmem>>, %arg3: memref<8x128xf32, #tpu.memory_space<vmem>>, %arg4: memref<32x128xf32, #tpu.memory_space<vmem>>, %arg5: memref<16x128xf32, #tpu.memory_space<vmem>>) attributes {dimension_semantics = [#tpu.dimension_semantics<parallel>], iteration_bounds = array<i64: 1>, scalar_prefetch = 0 : i64, scratch_operands = 0 : i64, tpu.core_type = #tpu.core_type<tc>, window_params = [{transform_indices = @transform_0, window_bounds = array<i64: 16, 32>}, {transform_indices = @transform_1, window_bounds = array<i64: 16, 4>}, {pipeline_mode = #tpu.pipeline_mode<synchronous>, transform_indices = @transform_2, window_bounds = array<i64: 8, 128>}, {pipeline_mode = #tpu.pipeline_mode<synchronous>, transform_indices = @transform_3, window_bounds = array<i64: 32, 128>}, {transform_indices = @transform_4, window_bounds = array<i64: 16, 128>}]} {
    %c0 = arith.constant 0 : index
    %c0_0 = arith.constant 0 : index
    %0 = vector.load %arg1[%c0, %c0_0] : memref<16x32xf32, #tpu.memory_space<vmem>>, vector<16x32xf32>
    %cst = arith.constant dense<0xFF800000> : vector<16xf32>
    %1 = vector.multi_reduction <maximumf>, %0, %cst [1] : vector<16x32xf32> to vector<16xf32>
    %2 = vector.shape_cast %1 : vector<16xf32> to vector<16x1xf32>
    %3 = vector.broadcast %2 : vector<16x1xf32> to vector<16x32xf32>
    %4 = arith.subf %0, %3 : vector<16x32xf32>
    %5 = math.exp %4 : vector<16x32xf32>
    %cst_1 = arith.constant dense<0.000000e+00> : vector<16xf32>
    %6 = vector.multi_reduction <add>, %5, %cst_1 [1] : vector<16x32xf32> to vector<16xf32>
    %7 = vector.shape_cast %6 : vector<16xf32> to vector<16x1xf32>
    %cst_2 = arith.constant 1.000000e+00 : f32
    %8 = vector.broadcast %cst_2 : f32 to vector<16x1xf32>
    %9 = arith.divf %8, %7 : vector<16x1xf32>
    %c0_3 = arith.constant 0 : index
    %c0_4 = arith.constant 0 : index
    %10 = vector.load %arg4[%c0_3, %c0_4] : memref<32x128xf32, #tpu.memory_space<vmem>>, vector<32x128xf32>
    %cst_5 = arith.constant dense<0.000000e+00> : vector<16x128xf32>
    %11 = tpu.matmul %5, %10, %cst_5 {dimension_numbers = #tpu.dot_dimension_numbers<[1], [0], [0], [1], [0, 0, 1, 1], [], []>} : vector<16x32xf32>, vector<32x128xf32>, vector<16x128xf32> -> vector<16x128xf32>
    %12 = vector.broadcast %9 : vector<16x1xf32> to vector<16x128xf32>
    %13 = arith.mulf %11, %12 : vector<16x128xf32>
    %c0_6 = arith.constant 0 : index
    %c0_7 = arith.constant 0 : index
    %14 = vector.load %arg2[%c0_6, %c0_7] : memref<16x4xf32, #tpu.memory_space<vmem>>, vector<16x4xf32>
    %c0_8 = arith.constant 0 : index
    %c0_9 = arith.constant 0 : index
    %15 = vector.load %arg3[%c0_8, %c0_9] : memref<8x128xf32, #tpu.memory_space<vmem>>, vector<8x128xf32>
    %16 = vector.extract_strided_slice %15 {offsets = [0, 0], sizes = [1, 128], strides = [1, 1]} : vector<8x128xf32> to vector<1x128xf32>
    %17 = vector.extract_strided_slice %15 {offsets = [1, 0], sizes = [1, 128], strides = [1, 1]} : vector<8x128xf32> to vector<1x128xf32>
    %18 = vector.extract_strided_slice %15 {offsets = [2, 0], sizes = [1, 128], strides = [1, 1]} : vector<8x128xf32> to vector<1x128xf32>
    %19 = vector.extract_strided_slice %15 {offsets = [3, 0], sizes = [1, 128], strides = [1, 1]} : vector<8x128xf32> to vector<1x128xf32>
    %20 = vector.extract_strided_slice %15 {offsets = [4, 0], sizes = [1, 128], strides = [1, 1]} : vector<8x128xf32> to vector<1x128xf32>
    %21 = vector.extract_strided_slice %14 {offsets = [0, 0], sizes = [16, 1], strides = [1, 1]} : vector<16x4xf32> to vector<16x1xf32>
    %22 = vector.extract_strided_slice %14 {offsets = [0, 1], sizes = [16, 1], strides = [1, 1]} : vector<16x4xf32> to vector<16x1xf32>
    %23 = vector.extract_strided_slice %14 {offsets = [0, 2], sizes = [16, 1], strides = [1, 1]} : vector<16x4xf32> to vector<16x1xf32>
    %24 = vector.extract_strided_slice %14 {offsets = [0, 3], sizes = [16, 1], strides = [1, 1]} : vector<16x4xf32> to vector<16x1xf32>
    %25 = vector.broadcast %21 : vector<16x1xf32> to vector<16x128xf32>
    %26 = vector.broadcast %16 : vector<1x128xf32> to vector<16x128xf32>
    %27 = arith.maximumf %25, %26 : vector<16x128xf32>
    %28 = vector.broadcast %22 : vector<16x1xf32> to vector<16x128xf32>
    %29 = vector.broadcast %17 : vector<1x128xf32> to vector<16x128xf32>
    %30 = arith.maximumf %28, %29 : vector<16x128xf32>
    %31 = vector.broadcast %23 : vector<16x1xf32> to vector<16x128xf32>
    %32 = vector.broadcast %18 : vector<1x128xf32> to vector<16x128xf32>
    %33 = arith.minimumf %31, %32 : vector<16x128xf32>
    %34 = vector.broadcast %24 : vector<16x1xf32> to vector<16x128xf32>
    %35 = vector.broadcast %19 : vector<1x128xf32> to vector<16x128xf32>
    %36 = arith.minimumf %34, %35 : vector<16x128xf32>
    %37 = vector.broadcast %21 : vector<16x1xf32> to vector<16x128xf32>
    %38 = vector.broadcast %16 : vector<1x128xf32> to vector<16x128xf32>
    %39 = arith.minimumf %37, %38 : vector<16x128xf32>
    %40 = vector.broadcast %22 : vector<16x1xf32> to vector<16x128xf32>
    %41 = vector.broadcast %17 : vector<1x128xf32> to vector<16x128xf32>
    %42 = arith.minimumf %40, %41 : vector<16x128xf32>
    %43 = vector.broadcast %23 : vector<16x1xf32> to vector<16x128xf32>
    %44 = vector.broadcast %18 : vector<1x128xf32> to vector<16x128xf32>
    %45 = arith.maximumf %43, %44 : vector<16x128xf32>
    %46 = vector.broadcast %24 : vector<16x1xf32> to vector<16x128xf32>
    %47 = vector.broadcast %19 : vector<1x128xf32> to vector<16x128xf32>
    %48 = arith.maximumf %46, %47 : vector<16x128xf32>
    %49 = arith.subf %27, %39 : vector<16x128xf32>
    %50 = arith.subf %30, %42 : vector<16x128xf32>
    %51 = arith.addf %49, %50 : vector<16x128xf32>
    %52 = arith.subf %45, %33 : vector<16x128xf32>
    %53 = arith.addf %51, %52 : vector<16x128xf32>
    %54 = arith.subf %48, %36 : vector<16x128xf32>
    %55 = arith.addf %53, %54 : vector<16x128xf32>
    %56 = arith.subf %23, %21 : vector<16x1xf32>
    %57 = arith.subf %24, %22 : vector<16x1xf32>
    %58 = arith.mulf %56, %57 : vector<16x1xf32>
    %59 = arith.subf %33, %27 : vector<16x128xf32>
    %cst_10 = arith.constant 0.000000e+00 : f32
    %60 = vector.broadcast %cst_10 : f32 to vector<16x128xf32>
    %61 = arith.maximumf %59, %60 : vector<16x128xf32>
    %62 = arith.subf %36, %30 : vector<16x128xf32>
    %cst_11 = arith.constant 0.000000e+00 : f32
    %63 = vector.broadcast %cst_11 : f32 to vector<16x128xf32>
    %64 = arith.maximumf %62, %63 : vector<16x128xf32>
    %65 = arith.mulf %61, %64 : vector<16x128xf32>
    %66 = vector.broadcast %58 : vector<16x1xf32> to vector<16x128xf32>
    %67 = vector.broadcast %20 : vector<1x128xf32> to vector<16x128xf32>
    %68 = arith.addf %66, %67 : vector<16x128xf32>
    %69 = arith.subf %68, %65 : vector<16x128xf32>
    %cst_12 = arith.constant 9.99999997E-7 : f32
    %70 = vector.broadcast %cst_12 : f32 to vector<16x128xf32>
    %71 = arith.addf %69, %70 : vector<16x128xf32>
    %72 = arith.divf %65, %71 : vector<16x128xf32>
    %73 = arith.subf %45, %39 : vector<16x128xf32>
    %cst_13 = arith.constant 0.000000e+00 : f32
    %74 = vector.broadcast %cst_13 : f32 to vector<16x128xf32>
    %75 = arith.maximumf %73, %74 : vector<16x128xf32>
    %76 = arith.subf %48, %42 : vector<16x128xf32>
    %cst_14 = arith.constant 0.000000e+00 : f32
    %77 = vector.broadcast %cst_14 : f32 to vector<16x128xf32>
    %78 = arith.maximumf %76, %77 : vector<16x128xf32>
    %79 = arith.mulf %75, %78 : vector<16x128xf32>
    %80 = arith.subf %79, %69 : vector<16x128xf32>
    %cst_15 = arith.constant 9.99999997E-7 : f32
    %81 = vector.broadcast %cst_15 : f32 to vector<16x128xf32>
    %82 = arith.addf %79, %81 : vector<16x128xf32>
    %83 = arith.divf %80, %82 : vector<16x128xf32>
    %84 = arith.subf %72, %83 : vector<16x128xf32>
    %cst_16 = arith.constant 2.000000e+00 : f32
    %85 = vector.broadcast %cst_16 : f32 to vector<16x128xf32>
    %86 = arith.mulf %85, %55 : vector<16x128xf32>
    %87 = arith.addf %86, %13 : vector<16x128xf32>
    %cst_17 = arith.constant 5.000000e+00 : f32
    %88 = vector.broadcast %cst_17 : f32 to vector<16x128xf32>
    %89 = arith.mulf %88, %84 : vector<16x128xf32>
    %90 = arith.subf %87, %89 : vector<16x128xf32>
    %c0_18 = arith.constant 0 : index
    %c0_19 = arith.constant 0 : index
    %91 = vector.load %arg5[%c0_18, %c0_19] : memref<16x128xf32, #tpu.memory_space<vmem>>, vector<16x128xf32>
    tpu.vector_store %arg5[%c0_18, %c0_19], %90 {strides = array<i32>} : memref<16x128xf32, #tpu.memory_space<vmem>>, vector<16x128xf32>,
    return
  }
  func.func @transform_0(%arg0: i32) -> (i32, i32) {
    %c0_i32 = arith.constant 0 : i32
    %c0_i32_0 = arith.constant 0 : i32
    return %arg0, %c0_i32 : i32, i32
  }
  func.func @transform_1(%arg0: i32) -> (i32, i32) {
    %c0_i32 = arith.constant 0 : i32
    %c0_i32_0 = arith.constant 0 : i32
    return %arg0, %c0_i32 : i32, i32
  }
  func.func @transform_2(%arg0: i32) -> (i32, i32) {
    %c0_i32 = arith.constant 0 : i32
    %c0_i32_0 = arith.constant 0 : i32
    %c0_i32_1 = arith.constant 0 : i32
    return %c0_i32, %c0_i32_0 : i32, i32
  }
  func.func @transform_3(%arg0: i32) -> (i32, i32) {
    %c0_i32 = arith.constant 0 : i32
    %c0_i32_0 = arith.constant 0 : i32
    %c0_i32_1 = arith.constant 0 : i32
    return %c0_i32, %c0_i32_0 : i32, i32
  }
  func.func @transform_4(%arg0: i32) -> (i32, i32) {
    %c0_i32 = arith.constant 0 : i32
    %c0_i32_0 = arith.constant 0 : i32
    return %arg0, %c0_i32 : i32, i32
  }
}

</mosaic_0001>

<llo_original>
// kernel: tpu_custom_call.1
$region0: #{tpu_custom_call.1}
  #allocation0 [shape = 'u32[]', space=smem, size = 0x4, offset = 0x4, fixed_abs, tag = 'smem constant byte address 0x4 - core index']
  #allocation1 [shape = 'u32[144,128]{1,0:T(1,128)}', space=vmem, size = 0x12000, scoped, tag = 'internal scratch']
  %s0 = inlined_call_operand.vmem [shape: f32[16,32], index: 0, kind: input, shape index: {}]
  %s1 = inlined_call_operand.vmem [shape: f32[16,4], index: 1, kind: input, shape index: {}]
  %s2 = inlined_call_operand.hbm [shape: f32[8,128], index: 2, kind: input, shape index: {}]
  %s3 = inlined_call_operand.hbm [shape: f32[32,128], index: 3, kind: input, shape index: {}]
  %s4 = inlined_call_operand.hbm [shape: f32[16,128], index: 4, kind: output, shape index: {}]
  %s5 = sld [smem:[#allocation0]]
  $region34: #{tpu_custom_call.1} parent=0
    _
  %s7 = ssub.s32 1, %s5
  %s8 = scalar_select 0, %s7, %s5
  $region1: #{tpu_custom_call.1} parent=0
    #allocation2 [shape = 'u8[4096]{0}', space=vmem, size = 0x1000, scoped, tag = 'input window, operand 2, single buffered']
    #allocation3 [shape = 's32[1]{0}', space=sflag, size = 0x4, scoped, tag = 'scoped memory for tpu_custom_call.1']
    #allocation4 [shape = 's32[1]{0}', space=sflag, size = 0x4, scoped, tag = 'scoped memory for tpu_custom_call.1']
    #allocation5 [shape = 'u8[16384]{0}', space=vmem, size = 0x4000, scoped, tag = 'input window, operand 3, single buffered']
    #allocation6 [shape = 's32[1]{0}', space=sflag, size = 0x4, scoped, tag = 'scoped memory for tpu_custom_call.1']
    #allocation7 [shape = 'u8[8192]{0}', space=vmem, size = 0x2000, scoped, tag = 'output window, operand 0, single buffered']
    %9 = vsyncpa [#allocation3], 0
    %10 = vsyncpa [#allocation6], 0
    %11 = vsyncpa [#allocation4], 0
    // Predicated region
    $region2: #{tpu_custom_call.1} parent=1 // pred_check
      _
    $region3: #{tpu_custom_call.1} parent=1 // pred_check_branch
      %13 = sbr.rel (0) target = $region5
    $region4: #{tpu_custom_call.1} parent=1 // pred_region
      _
    $region5: #{tpu_custom_call.1} parent=1 // pred_fallthru
      _
    // Predicated region
    $region6: #{tpu_custom_call.1} parent=1 // pred_check
      _
    $region7: #{tpu_custom_call.1} parent=1 // pred_check_branch
      %15 = sbr.rel (0) target = $region9
    $region8: #{tpu_custom_call.1} parent=1 // pred_region
      _
    $region9: #{tpu_custom_call.1} parent=1 // pred_fallthru
      _
    // Predicated region
    $region10: #{tpu_custom_call.1} parent=1 // pred_check
      _
    $region11: #{tpu_custom_call.1} parent=1 // pred_check_branch
      %17 = sbr.rel (0) target = $region13
    $region12: #{tpu_custom_call.1} parent=1 // pred_region
      %s19 = ssub.s32 128, 128
      %20 = vsyncadd [#allocation3], %s19
      %s22 = sshll.u32 [#allocation2], 4
      %s23 = int_to_ptr.vmem [resolvable:$true] %s22
      %25 = dma.hbm_to_vmem [thread:$0]  %s2, 128, %s23, [#allocation3]
    $region13: #{tpu_custom_call.1} parent=1 // pred_fallthru
      _
    // Predicated region
    $region14: #{tpu_custom_call.1} parent=1 // pred_check
      _
    $region15: #{tpu_custom_call.1} parent=1 // pred_check_branch
      %27 = sbr.rel (0) target = $region17
    $region16: #{tpu_custom_call.1} parent=1 // pred_region
      %s29 = ssub.s32 512, 512
      %30 = vsyncadd [#allocation6], %s29
      %s31 = sshll.u32 [#allocation5], 4
      %s32 = int_to_ptr.vmem [resolvable:$true] %s31
      %37 = dma.hbm_to_vmem [thread:$0]  %s3, 512, %s32, [#allocation6], 128, 128, 8
    $region17: #{tpu_custom_call.1} parent=1 // pred_fallthru
      _
    // Predicated region
    $region18: #{tpu_custom_call.1} parent=1 // pred_check
      _
    $region19: #{tpu_custom_call.1} parent=1 // pred_check_branch
      %39 = sbr.rel (0) target = $region21
    $region20: #{tpu_custom_call.1} parent=1 // pred_region
      %40 = dma.done [#allocation3], 128
    $region21: #{tpu_custom_call.1} parent=1 // pred_fallthru
      _
    // Predicated region
    $region22: #{tpu_custom_call.1} parent=1 // pred_check
      _
    $region23: #{tpu_custom_call.1} parent=1 // pred_check_branch
      %42 = sbr.rel (0) target = $region25
    $region24: #{tpu_custom_call.1} parent=1 // pred_region
      %43 = dma.done [#allocation6], 512
    $region25: #{tpu_custom_call.1} parent=1 // pred_fallthru
      _
    %v44 = vld [vmem:[%s0] sm:$0xff]
    %v45 = vld [vmem:[%s0 + $0x8] sm:$0xff]
    %vm46 = vcmask 261120
    %v47 = vsel %vm46, %v44, -inf
    %48 = vmax.xlane.f32.xlu0 %v47
    %v49 = vpop.xlane.xlu0 %48
    %v50 = vsel %vm46, %v45, -inf
    %51 = vmax.xlane.f32.xlu0 %v50
    %v52 = vpop.xlane.xlu0 %51
    %v53 = vsub.f32 %v44, %v49
    %v54 = vsub.f32 %v45, %v52
    %v55 = vmul.f32 %v53, 1.442695
    %v56 = vpow.pop %v55
    %v57 = vmul.f32 %v54, 1.442695
    %v58 = vpow.pop %v57
    %v59 = vsel %vm46, %v56, 0.0
    %60 = vadd.xlane.f32.xlu0 %v59
    %v61 = vpop.xlane.xlu0 %60
    %v62 = vsel %vm46, %v58, 0.0
    %63 = vadd.xlane.f32.xlu0 %v62
    %v64 = vpop.xlane.xlu0 %63
    %v65 = vrcp.pop %v61
    %v66 = vmul.f32 1.0, %v65
    %v67 = vrcp.pop %v64
    %v68 = vmul.f32 1.0, %v67
    %v69 = vld [vmem:[#allocation5] sm:$0xff]
    %v70 = vld [vmem:[#allocation5 + $0x8] sm:$0xff]
    %v71 = vld [vmem:[#allocation5 + $0x10] sm:$0xff]
    %v72 = vld [vmem:[#allocation5 + $0x18] sm:$0xff]
    %v74 = vsel %vm46, %v56, 0
    %v77 = vsel %vm46, %v58, 0
    %79 = vmatprep.subr.mxu0 0.0
    %80 = vmatpush1.msra.mxu0 0.0
    %81 = vmatprep.subr.mxu0 0.0
    %82 = vmatpush1.msra.mxu0 0.0
    %83 = vmatprep.subr.mxu0 0.0
    %84 = vmatpush1.msra.mxu0 0.0
    %85 = vmatprep.subr.mxu0 0.0
    %86 = vmatpush1.msra.mxu0 0.0
    %87 = vmatprep.subr.mxu0 0.0
    %88 = vmatpush1.msra.mxu0 0.0
    %89 = vmatprep.subr.mxu0 0.0
    %90 = vmatpush1.msra.mxu0 0.0
    %91 = vmatprep.subr.mxu0 0.0
    %92 = vmatpush1.msra.mxu0 0.0
    %93 = vmatprep.subr.mxu0 0.0
    %94 = vmatpush1.msra.mxu0 0.0
    %95 = vmatprep.subr.mxu0 0.0
    %96 = vmatpush1.msra.mxu0 0.0
    %97 = vmatprep.subr.mxu0 0.0
    %98 = vmatpush1.msra.mxu0 0.0
    %99 = vmatprep.subr.mxu0 0.0
    %100 = vmatpush1.msra.mxu0 0.0
    %101 = vmatprep.subr.mxu0 0.0
    %102 = vmatpush1.msra.mxu0 0.0
    %103 = vmatprep.subr.mxu0 0.0
    %104 = vmatpush1.msra.mxu0 %v72
    %105 = vmatprep.subr.mxu0 0.0
    %106 = vmatpush1.msra.mxu0 %v71
    %107 = vmatprep.subr.mxu0 0.0
    %108 = vmatpush1.msra.mxu0 %v70
    %109 = vmatprep.subr.mxu0 0.0
    %110 = vmatpush1.msra.mxu0 %v69
    %111 = vmatprep.subr.mxu0 0.0
    %112 = vmatpush2.msra.mxu0 0.0
    %113 = vmatprep.subr.mxu0 0.0
    %114 = vmatpush2.msra.mxu0 0.0
    %115 = vmatprep.subr.mxu0 0.0
    %116 = vmatpush2.msra.mxu0 0.0
    %117 = vmatprep.subr.mxu0 0.0
    %118 = vmatpush2.msra.mxu0 0.0
    %119 = vmatprep.subr.mxu0 0.0
    %120 = vmatpush2.msra.mxu0 0.0
    %121 = vmatprep.subr.mxu0 0.0
    %122 = vmatpush2.msra.mxu0 0.0
    %123 = vmatprep.subr.mxu0 0.0
    %124 = vmatpush2.msra.mxu0 0.0
    %125 = vmatprep.subr.mxu0 0.0
    %126 = vmatpush2.msra.mxu0 0.0
    %127 = vmatprep.subr.mxu0 0.0
    %128 = vmatpush2.msra.mxu0 0.0
    %129 = vmatprep.subr.mxu0 0.0
    %130 = vmatpush2.msra.mxu0 0.0
    %131 = vmatprep.subr.mxu0 0.0
    %132 = vmatpush2.msra.mxu0 0.0
    %133 = vmatprep.subr.mxu0 0.0
    %134 = vmatpush2.msra.mxu0 0.0
    %135 = vmatprep.subr.mxu0 0.0
    %136 = vmatpush2.msra.mxu0 0.0
    %137 = vmatprep.subr.mxu0 0.0
    %138 = vmatpush2.msra.mxu0 0.0
    %139 = vmatprep.subr.mxu0 0.0
    %140 = vmatpush2.msra.mxu0 0.0
    %141 = vmatprep.subr.mxu0 0.0
    %142 = vmatpush2.msra.mxu0 0.0
    %143 = vmatprep.mubr.f32.mxu0 0.0
    %144 = vmatmul.mubr.f32.gmra.mxu0 %v74
    %v145 = vpop.f32.mrf.mxu0
    %v146 = vadd.f32 0.0, %v145
    %v147 = vpop.f32.mrf.mxu0
    %148 = vmatprep.mubr.f32.mxu0 0.0
    %149 = vmatmul.mubr.f32.gmra.mxu0 %v77
    %v150 = vpop.f32.mrf.mxu0
    %v151 = vadd.f32 0.0, %v150
    %v152 = vpop.f32.mrf.mxu0
    %153 = vdwg.mxu0
    %v154 = vmul.f32 %v146, %v66
    %v155 = vmul.f32 %v151, %v68
    %v156 = vld [vmem:[%s1] sm:$0xff]
    %v157 = vld [vmem:[%s1 + $0x8] sm:$0xff]
    %v158 = vld [vmem:[#allocation2] sm:$0xff]
    %160 = vset.pattern.permute.xlu0 0
    %161 = vperm.xlu0 %160, %v156
    %v162 = vpop.permute.xlu0 %161
    %165 = vset.pattern.permute.xlu0 0
    %166 = vperm.xlu0 %165, %v157
    %v167 = vpop.permute.xlu0 %166
    %v169 = vlaneseq
    %v170 = vshrl.u32 %v169, 7
    %v171 = vsub.s32 0, %v170
    %v172 = vrot.slane %v158, %v171
    %v173 = vmax.f32 %v162, %v172
    %v174 = vmax.f32 %v167, %v172
    %175 = vset.pattern.permute.xlu0 1
    %176 = vperm.xlu0 %175, %v156
    %v177 = vpop.permute.xlu0 %176
    %179 = vset.pattern.permute.xlu0 1
    %180 = vperm.xlu0 %179, %v157
    %v181 = vpop.permute.xlu0 %180
    %v183 = vlaneseq
    %v184 = vshrl.u32 %v183, 7
    %v185 = vsub.s32 1, %v184
    %v186 = vrot.slane %v158, %v185
    %v187 = vmax.f32 %v177, %v186
    %v188 = vmax.f32 %v181, %v186
    %189 = vset.pattern.permute.xlu0 2
    %190 = vperm.xlu0 %189, %v156
    %v191 = vpop.permute.xlu0 %190
    %193 = vset.pattern.permute.xlu0 2
    %194 = vperm.xlu0 %193, %v157
    %v195 = vpop.permute.xlu0 %194
    %v197 = vlaneseq
    %v198 = vshrl.u32 %v197, 7
    %v199 = vsub.s32 2, %v198
    %v200 = vrot.slane %v158, %v199
    %v201 = vmin.f32 %v191, %v200
    %v202 = vmin.f32 %v195, %v200
    %203 = vset.pattern.permute.xlu0 3
    %204 = vperm.xlu0 %203, %v156
    %v205 = vpop.permute.xlu0 %204
    %207 = vset.pattern.permute.xlu0 3
    %208 = vperm.xlu0 %207, %v157
    %v209 = vpop.permute.xlu0 %208
    %v211 = vlaneseq
    %v212 = vshrl.u32 %v211, 7
    %v213 = vsub.s32 3, %v212
    %v214 = vrot.slane %v158, %v213
    %v215 = vmin.f32 %v205, %v214
    %v216 = vmin.f32 %v209, %v214
    %v217 = vmin.f32 %v162, %v172
    %v218 = vmin.f32 %v167, %v172
    %v219 = vmin.f32 %v177, %v186
    %v220 = vmin.f32 %v181, %v186
    %v221 = vmax.f32 %v191, %v200
    %v222 = vmax.f32 %v195, %v200
    %v223 = vmax.f32 %v205, %v214
    %v224 = vmax.f32 %v209, %v214
    %v225 = vsub.f32 %v173, %v217
    %v226 = vsub.f32 %v174, %v218
    %v227 = vsub.f32 %v187, %v219
    %v228 = vsub.f32 %v188, %v220
    %v229 = vadd.f32 %v225, %v227
    %v230 = vadd.f32 %v226, %v228
    %v231 = vsub.f32 %v221, %v201
    %v232 = vsub.f32 %v222, %v202
    %v233 = vadd.f32 %v229, %v231
    %v234 = vadd.f32 %v230, %v232
    %v235 = vsub.f32 %v223, %v215
    %v236 = vsub.f32 %v224, %v216
    %v237 = vadd.f32 %v233, %v235
    %v238 = vadd.f32 %v234, %v236
    %239 = vrot.lane.b32.xlu0 %v156, 2
    %v240 = vpop.permute.xlu0 %239
    %241 = vrot.lane.b32.xlu0 %v157, 2
    %v242 = vpop.permute.xlu0 %241
    %v245 = vsub.f32 %v156, %v240
    %v246 = vsub.f32 %v157, %v242
    %249 = vrot.lane.b32.xlu0 %v245, 127
    %v250 = vpop.permute.xlu0 %249
    %251 = vrot.lane.b32.xlu0 %v246, 127
    %v252 = vpop.permute.xlu0 %251
    %v255 = vmul.f32 %v245, %v250
    %v256 = vmul.f32 %v246, %v252
    %v257 = vsub.f32 %v201, %v173
    %v258 = vsub.f32 %v202, %v174
    %v259 = vmax.f32 %v257, 0.0
    %v260 = vmax.f32 %v258, 0.0
    %v261 = vsub.f32 %v215, %v187
    %v262 = vsub.f32 %v216, %v188
    %v263 = vmax.f32 %v261, 0.0
    %v264 = vmax.f32 %v262, 0.0
    %v265 = vmul.f32 %v259, %v263
    %v266 = vmul.f32 %v260, %v264
    %268 = vset.pattern.permute.xlu0 2
    %269 = vperm.xlu0 %268, %v255
    %v270 = vpop.permute.xlu0 %269
    %273 = vset.pattern.permute.xlu0 2
    %274 = vperm.xlu0 %273, %v256
    %v275 = vpop.permute.xlu0 %274
    %v277 = vlaneseq
    %v278 = vshrl.u32 %v277, 7
    %v279 = vsub.s32 4, %v278
    %v280 = vrot.slane %v158, %v279
    %v281 = vadd.f32 %v270, %v280
    %v282 = vadd.f32 %v275, %v280
    %v283 = vsub.f32 %v281, %v265
    %v284 = vsub.f32 %v282, %v266
    %v285 = vadd.f32 %v283, 1e-06
    %v286 = vadd.f32 %v284, 1e-06
    %v287 = vrcp.pop %v285
    %v288 = vmul.f32 %v265, %v287
    %v289 = vrcp.pop %v286
    %v290 = vmul.f32 %v266, %v289
    %v291 = vsub.f32 %v221, %v217
    %v292 = vsub.f32 %v222, %v218
    %v293 = vmax.f32 %v291, 0.0
    %v294 = vmax.f32 %v292, 0.0
    %v295 = vsub.f32 %v223, %v219
    %v296 = vsub.f32 %v224, %v220
    %v297 = vmax.f32 %v295, 0.0
    %v298 = vmax.f32 %v296, 0.0
    %v299 = vmul.f32 %v293, %v297
    %v300 = vmul.f32 %v294, %v298
    %v301 = vsub.f32 %v299, %v283
    %v302 = vsub.f32 %v300, %v284
    %v303 = vadd.f32 %v299, 1e-06
    %v304 = vadd.f32 %v300, 1e-06
    %v305 = vrcp.pop %v303
    %v306 = vmul.f32 %v301, %v305
    %v307 = vrcp.pop %v304
    %v308 = vmul.f32 %v302, %v307
    %v309 = vsub.f32 %v288, %v306
    %v310 = vsub.f32 %v290, %v308
    %v311 = vmul.f32 %v237, 2.0
    %v312 = vmul.f32 %v238, 2.0
    %v313 = vadd.f32 %v311, %v154
    %v314 = vadd.f32 %v312, %v155
    %v315 = vmul.f32 %v309, 5.0
    %v316 = vmul.f32 %v310, 5.0
    %v317 = vsub.f32 %v313, %v315
    %v318 = vsub.f32 %v314, %v316
    %319 = vst [vmem:[#allocation7] sm:$0xff] %v317
    %320 = vst [vmem:[#allocation7 + $0x8] sm:$0xff] %v318
    // Predicated region
    $region26: #{tpu_custom_call.1} parent=1 // pred_check
      _
    $region27: #{tpu_custom_call.1} parent=1 // pred_check_branch
      %322 = sbr.rel (0) target = $region29
    $region28: #{tpu_custom_call.1} parent=1 // pred_region
      %s324 = ssub.s32 256, 256
      %325 = vsyncadd [#allocation4], %s324
      %s326 = sshll.u32 [#allocation7], 4
      %s327 = int_to_ptr.vmem [resolvable:$true] %s326
      %332 = dma.vmem_to_hbm [thread:$0]  %s327, 256, %s4, [#allocation4], 128, 128, 8
    $region29: #{tpu_custom_call.1} parent=1 // pred_fallthru
      _
    // Predicated region
    $region30: #{tpu_custom_call.1} parent=1 // pred_check
      _
    $region31: #{tpu_custom_call.1} parent=1 // pred_check_branch
      %334 = sbr.rel (0) target = $region33
    $region32: #{tpu_custom_call.1} parent=1 // pred_region
      %335 = dma.done [#allocation4], 256
    $region33: #{tpu_custom_call.1} parent=1 // pred_fallthru
      _
    %336 = vsyncpa [#allocation3], 1
    %337 = vsyncpa [#allocation6], 1
    %338 = vsyncpa [#allocation4], 1

</llo_original>
